<compile_context>
chip_gen: v5e
topology: v5e:2x2
jax: 0.10.0
libtpu: 0.0.40
codegen_flags: <defaults>
</compile_context>

<pallas_src>
import math
import functools

import jax
import jax.numpy as jnp
from jax.experimental import pallas as pl
from jax.experimental.pallas import tpu as pltpu


# ------------------------------ small helpers ------------------------------

def _pick_tile(dim, cap, align):
    """Largest `align`-multiple <= cap that evenly divides dim (full dim if small).

    Falls back to the full dimension if nothing divides (block == full array dim
    is always legal, but may cost VMEM for very large awkward dims)."""
    if dim <= cap:
        return dim
    best = None
    t = align
    while t <= cap:
        if dim % t == 0:
            best = t
        t += align
    return best if best is not None else dim


def _sublane_align(dtype):
    """Sublane packing of the dtype: f32 -> 8, bf16 -> 16, int8/fp8 -> 32."""
    return {4: 8, 2: 16, 1: 32}.get(jnp.dtype(dtype).itemsize, 8)


def _default_vmem_limit():
    """~half of physical VMEM: 64 MiB on v5e/v6e (128 MiB), 32 MiB on v7x (64 MiB)."""
    try:
        cap = int(pltpu.get_tpu_info().vmem_capacity_bytes)
        return max(32 * 1024 * 1024, min(96 * 1024 * 1024, cap // 2))
    except Exception:
        return 32 * 1024 * 1024


_VMEM_LIMIT = _default_vmem_limit()


# ----------------------------- linear kernels ------------------------------

def _linear_kernel(x_ref, w_ref, b_ref, o_ref, acc_ref):
    kstep = pl.program_id(2)

    @pl.when(kstep == 0)
    def _():
        acc_ref[...] = jnp.zeros_like(acc_ref)

    acc_ref[...] += jnp.dot(x_ref[...], w_ref[...],
                            preferred_element_type=jnp.float32)

    @pl.when(kstep == pl.num_programs(2) - 1)
    def _():
        o_ref[...] = (acc_ref[...] + b_ref[...]).astype(o_ref.dtype)


def pallas_linear(x2d, w, b, *, tm_cap=512, tn_cap=256, tk_cap=1024):
    """x2d: (M, K), w: (K, N), b: (N,)  ->  (M, N). Tiled matmul + bias."""
    M, K = x2d.shape
    K2, N = w.shape
    assert K == K2
    tm = _pick_tile(M, tm_cap, _sublane_align(x2d.dtype))
    tn = _pick_tile(N, tn_cap, 128)
    tk = _pick_tile(K, tk_cap, 128)
    grid = (M // tm, N // tn, K // tk)
    return pl.pallas_call(
        _linear_kernel,
        out_shape=jax.ShapeDtypeStruct((M, N), x2d.dtype),
        grid=grid,
        in_specs=[pl.BlockSpec((tm, tk), lambda i, j, k: (i, k)),
                  pl.BlockSpec((tk, tn), lambda i, j, k: (k, j)),
                  pl.BlockSpec((1, tn), lambda i, j, k: (0, j))],
        out_specs=pl.BlockSpec((tm, tn), lambda i, j, k: (i, j)),
        scratch_shapes=[pltpu.VMEM((tm, tn), jnp.float32)],
        compiler_params=pltpu.CompilerParams(
            dimension_semantics=("parallel", "parallel", "arbitrary"),
            vmem_limit_bytes=_VMEM_LIMIT),
    )(x2d, w, b.reshape(1, N))


def _kv_proj_kernel(x_ref, wk_ref, wv_ref, bv_ref, ko_ref, vo_ref,
                    acck_ref, accv_ref):
    kstep = pl.program_id(2)

    @pl.when(kstep == 0)
    def _():
        acck_ref[...] = jnp.zeros_like(acck_ref)
        accv_ref[...] = jnp.zeros_like(accv_ref)

    x = x_ref[...]                       # shared streaming read of kv_in tile
    acck_ref[...] += jnp.dot(x, wk_ref[...], preferred_element_type=jnp.float32)
    accv_ref[...] += jnp.dot(x, wv_ref[...], preferred_element_type=jnp.float32)

    @pl.when(kstep == pl.num_programs(2) - 1)
    def _():
        ko_ref[...] = acck_ref[...].astype(ko_ref.dtype)          # key: no bias
        vo_ref[...] = (accv_ref[...] + bv_ref[...]).astype(vo_ref.dtype)


def pallas_kv_proj(x2d, wk, wv, bv, *, tm_cap=512, tn_cap=256, tk_cap=1024):
    """Fused K/V projection sharing a single streaming read of x2d."""
    M, K = x2d.shape
    N = wk.shape[1]
    assert wk.shape == (K, N) and wv.shape == (K, N)
    tm = _pick_tile(M, tm_cap, _sublane_align(x2d.dtype))
    tn = _pick_tile(N, tn_cap, 128)
    tk = _pick_tile(K, tk_cap, 128)
    grid = (M // tm, N // tn, K // tk)
    out_shapes = (jax.ShapeDtypeStruct((M, N), x2d.dtype),
                  jax.ShapeDtypeStruct((M, N), x2d.dtype))
    return pl.pallas_call(
        _kv_proj_kernel,
        out_shape=out_shapes,
        grid=grid,
        in_specs=[pl.BlockSpec((tm, tk), lambda i, j, k: (i, k)),
                  pl.BlockSpec((tk, tn), lambda i, j, k: (k, j)),
                  pl.BlockSpec((tk, tn), lambda i, j, k: (k, j)),
                  pl.BlockSpec((1, tn), lambda i, j, k: (0, j))],
        out_specs=(pl.BlockSpec((tm, tn), lambda i, j, k: (i, j)),
                   pl.BlockSpec((tm, tn), lambda i, j, k: (i, j))),
        scratch_shapes=[pltpu.VMEM((tm, tn), jnp.float32),
                        pltpu.VMEM((tm, tn), jnp.float32)],
        compiler_params=pltpu.CompilerParams(
            dimension_semantics=("parallel", "parallel", "arbitrary"),
            vmem_limit_bytes=_VMEM_LIMIT),
    )(x2d, wk, wv, bv.reshape(1, N))


# ---------------------------- attention kernel -----------------------------
# Flash-style: grid = (batch, L-tiles, S-tiles) = ("parallel","parallel",
# "arbitrary"). q/k/v blocks are lane-dense (1, T, C); heads are contiguous
# lane slices staged into small head-major VMEM scratch so QK^T and P@V are
# single H-batched dot_generals. q (normalized / pre-scaled) is prepared once
# per (b, L-tile) at si==0 and stays resident across the S sweep.

def _attn_kernel(smul_ref, q_ref, k_ref, v_ref, bias_ref, o_ref,
                 q_scr, k_scr, v_scr, m_scr, l_scr, acc_scr, *,
                 scale, l2_norm, num_heads, head_dim):
    H, Dh = num_heads, head_dim
    si = pl.program_id(2)

    @pl.when(si == 0)
    def _():
        m_scr[...] = jnp.full_like(m_scr, -jnp.inf)
        l_scr[...] = jnp.zeros_like(l_scr)
        acc_scr[...] = jnp.zeros_like(acc_scr)
        # Head-major, pre-scaled query (hoists L2-norm / scale out of S loop).
        for h in range(H):
            qh = q_ref[0, :, h * Dh:(h + 1) * Dh].astype(jnp.float32)   # (tL, Dh)
            if l2_norm:
                inv = jax.lax.rsqrt(
                    jnp.maximum(jnp.sum(qh * qh, axis=-1, keepdims=True), 1e-24))
                qh = qh * inv * smul_ref[h]
            elif scale != 1.0:
                qh = qh * scale          # fold softmax scale into q (once)
            q_scr[h] = qh.astype(q_scr.dtype)

    # Stage K/V head-major (contiguous lane slices of the lane-dense block).
    for h in range(H):
        k_scr[h] = k_ref[0, :, h * Dh:(h + 1) * Dh]
        v_scr[h] = v_ref[0, :, h * Dh:(h + 1) * Dh]

    k_hm = k_scr[...]                                             # (H, ts, Dh)
    if l2_norm:
        kf = k_hm.astype(jnp.float32)
        kf = kf * jax.lax.rsqrt(
            jnp.maximum(jnp.sum(kf * kf, axis=-1, keepdims=True), 1e-24))
        k_hm = kf.astype(k_hm.dtype)
    v_hm = v_scr[...]                                             # (H, ts, Dh)

    # Q @ K^T batched over heads (contract Dh, batch H)  ->  (H, tL, ts)
    s = jax.lax.dot_general(q_scr[...], k_hm, (((2,), (2,)), ((0,), (0,))),
                            preferred_element_type=jnp.float32)
    s = s + bias_ref[0].astype(jnp.float32)        # (Hb, tL, ts) broadcasts

    # online softmax update (f32)
    m_prev = m_scr[...]                                           # (H, tL, 1)
    m_cur = jnp.max(s, axis=-1, keepdims=True)
    # finite clamp guards fully -inf-masked rows (yields zeros instead of NaN)
    m_next = jnp.maximum(jnp.maximum(m_prev, m_cur), -1e30)
    alpha = jnp.exp(m_prev - m_next)
    p = jnp.exp(s - m_next)
    l_scr[...] = alpha * l_scr[...] + jnp.sum(p, axis=-1, keepdims=True)
    # P @ V batched over heads (contract ts, batch H)  ->  (H, tL, Dh)
    pv = jax.lax.dot_general(p.astype(v_hm.dtype), v_hm,
                             (((2,), (1,)), ((0,), (0,))),
                             preferred_element_type=jnp.float32)
    acc_scr[...] = alpha * acc_scr[...] + pv
    m_scr[...] = m_next

    @pl.when(si == pl.num_programs(2) - 1)
    def _():
        inv_l = pl.reciprocal(jnp.maximum(l_scr[...], 1e-30), approx=True)
        out = acc_scr[...] * inv_l                                # (H, tL, Dh)
        # Per-head writes land in contiguous lane ranges of the lane-dense
        # (1, tL, C) output block; the HBM writeback is a single dense store.
        for h in range(H):
            o_ref[0, :, h * Dh:(h + 1) * Dh] = out[h].astype(o_ref.dtype)


def pallas_attention(q, k, v, bias, scale_mul, *, scale, l2_norm, num_heads,
                     l_tile_cap=128, s_tile_cap=128):
    """q: (B, L, C), k/v: (B, S, C), bias: (B|1, H|1, L, S), scale_mul: (H,)."""
    B, L, C = q.shape
    S = k.shape[1]
    H = num_heads
    assert C % H == 0
    Dh = C // H
    assert bias.ndim == 4 and bias.shape[2:] == (L, S)
    Bb, Hb = bias.shape[0], bias.shape[1]
    assert Bb in (1, B) and Hb in (1, H)

    align = _sublane_align(q.dtype)
    tl = _pick_tile(L, l_tile_cap, align)
    ts = _pick_tile(S, s_tile_cap, 128)    # bias last dim: 128-multiple or full
    n_l = L // tl
    n_s = S // ts

    kern = functools.partial(_attn_kernel, scale=scale, l2_norm=l2_norm,
                             num_heads=H, head_dim=Dh)

    if Bb == B:
        bias_map = lambda b, li, si: (b, 0, li, si)      # noqa: E731
    else:
        bias_map = lambda b, li, si: (0, 0, li, si)      # noqa: E731 (bcast batch)

    return pl.pallas_call(
        kern,
        out_shape=jax.ShapeDtypeStruct((B, L, C), q.dtype),
        grid=(B, n_l, n_s),
        in_specs=[
            pl.BlockSpec(memory_space=pltpu.MemorySpace.SMEM),              # scale_mul
            pl.BlockSpec((1, tl, C), lambda b, li, si: (b, li, 0)),         # q
            pl.BlockSpec((1, ts, C), lambda b, li, si: (b, si, 0)),         # k
            pl.BlockSpec((1, ts, C), lambda b, li, si: (b, si, 0)),         # v
            pl.BlockSpec((1, Hb, tl, ts), bias_map),                        # bias
        ],
        out_specs=pl.BlockSpec((1, tl, C), lambda b, li, si: (b, li, 0)),
        scratch_shapes=[
            pltpu.VMEM((H, tl, Dh), q.dtype),     # resident pre-scaled q (head-major)
            pltpu.VMEM((H, ts, Dh), k.dtype),     # head-major K staging
            pltpu.VMEM((H, ts, Dh), v.dtype),     # head-major V staging
            pltpu.VMEM((H, tl, 1), jnp.float32),  # running max (TODO(synk): pack lanes)
            pltpu.VMEM((H, tl, 1), jnp.float32),  # running denom
            pltpu.VMEM((H, tl, Dh), jnp.float32)],  # running acc
        compiler_params=pltpu.CompilerParams(
            dimension_semantics=("parallel", "parallel", "arbitrary"),
            vmem_limit_bytes=_VMEM_LIMIT),
    )(scale_mul, q, k, v, bias)


# --------------------------- module forward pass ---------------------------

def init_params(key, embed_dim, num_heads, attn_l2_norm=False):
    ks = jax.random.split(key, 7)
    std = 0.02
    p = {
        "wq": jax.random.normal(ks[0], (embed_dim, embed_dim), jnp.float32) * std,
        "bq": jax.random.normal(ks[1], (embed_dim,), jnp.float32) * std,
        "wk": jax.random.normal(ks[2], (embed_dim, embed_dim), jnp.float32) * std,
        "wv": jax.random.normal(ks[3], (embed_dim, embed_dim), jnp.float32) * std,
        "bv": jax.random.normal(ks[4], (embed_dim,), jnp.float32) * std,
        "wp": jax.random.normal(ks[5], (embed_dim, embed_dim), jnp.float32) * std,
        "bp": jax.random.normal(ks[6], (embed_dim,), jnp.float32) * std,
    }
    # scale_mul_1H11 init: log(4.0) per head (only used when attn_l2_norm=True)
    p["scale_mul_log"] = jnp.full((num_heads,), math.log(4.0), jnp.float32)
    return p


def modified_self_attention(params, feat, prev_feat, attn_bias, *,
                            num_heads, attn_l2_norm=False):
    B, L, C = feat.shape
    prev_L = prev_feat.shape[1]
    S = prev_L + L
    assert C % num_heads == 0
    Dh = C // num_heads

    # TODO(synk): avoid this materialized concat by fusing Q into a QKV pass
    # over feat and a KV pass over prev_feat writing shared K/V row-blocks.
    kv_in = jnp.concatenate([prev_feat, feat], axis=1).reshape(B * S, C)

    q = pallas_linear(feat.reshape(B * L, C), params["wq"], params["bq"])
    k, v = pallas_kv_proj(kv_in, params["wk"], params["wv"], params["bv"])

    # lane-dense (B, T, C) views -> no HBM transposes, heads split in-kernel
    q3 = q.reshape(B, L, C)
    k3 = k.reshape(B, S, C)
    v3 = v.reshape(B, S, C)

    if attn_l2_norm:
        scale = 1.0
        scale_mul = jnp.exp(jnp.minimum(params["scale_mul_log"],
                                        math.log(100.0))).astype(jnp.float32)
    else:
        scale = 0.25 / math.sqrt(Dh)
        scale_mul = jnp.ones((num_heads,), jnp.float32)   # unused in kernel

    out = pallas_attention(q3, k3, v3, attn_bias, scale_mul,
                           scale=scale, l2_norm=attn_l2_norm,
                           num_heads=num_heads)
    out = out.reshape(B * L, C)                         # free view
    out = pallas_linear(out, params["wp"], params["bp"])
    return out.reshape(B, L, C)


# ------------------------------ pure-JAX ref -------------------------------

def reference(params, feat, prev_feat, attn_bias, *, num_heads, attn_l2_norm=False):
    B, L, C = feat.shape
    S = prev_feat.shape[1] + L
    Dh = C // num_heads
    kv_in = jnp.concatenate([prev_feat, feat], axis=1)
    q = feat @ params["wq"] + params["bq"]
    k = kv_in @ params["wk"]
    v = kv_in @ params["wv"] + params["bv"]
    q = q.reshape(B, L, num_heads, Dh).transpose(0, 2, 1, 3)
    k = k.reshape(B, S, num_heads, Dh).transpose(0, 2, 1, 3)
    v = v.reshape(B, S, num_heads, Dh).transpose(0, 2, 1, 3)
    if attn_l2_norm:
        scale = 1.0
        scale_mul = jnp.exp(jnp.minimum(params["scale_mul_log"], math.log(100.0)))
        scale_mul = scale_mul.reshape(1, num_heads, 1, 1)
        qn = jnp.sqrt(jnp.sum(q * q, axis=-1, keepdims=True))
        kn = jnp.sqrt(jnp.sum(k * k, axis=-1, keepdims=True))
        q = q / jnp.maximum(qn, 1e-12) * scale_mul
        k = k / jnp.maximum(kn, 1e-12)
    else:
        scale = 0.25 / math.sqrt(Dh)
    s = jnp.einsum("bhld,bhsd->bhls", q, k) * scale + attn_bias
    p = jax.nn.softmax(s, axis=-1)
    o = jnp.einsum("bhls,bhsd->bhld", p, v)
    o = o.transpose(0, 2, 1, 3).reshape(B, L, C)
    return o @ params["wp"] + params["bp"]


# ---------------------------------- main -----------------------------------

if __name__ == "__main__":
    B, L, prev_L = 2, 8, 8
    embed_dim, num_heads = 64, 4
    S = prev_L + L

    key = jax.random.PRNGKey(0)
    k_feat, k_prev, k_bias, k_params = jax.random.split(key, 4)

    feat = jax.random.normal(k_feat, (B, L, embed_dim), jnp.float32)
    prev_feat = jax.random.normal(k_prev, (B, prev_L, embed_dim), jnp.float32)
    attn_bias = 0.5 * jax.random.normal(k_bias, (B, num_heads, L, S), jnp.float32)

    params = init_params(k_params, embed_dim, num_heads)

    # 1) default path (attn_l2_norm=False), f32
    out = modified_self_attention(params, feat, prev_feat, attn_bias,
                                  num_heads=num_heads, attn_l2_norm=False)
    out = jax.block_until_ready(out)
    ref = reference(params, feat, prev_feat, attn_bias,
                    num_heads=num_heads, attn_l2_norm=False)
    assert out.shape == (B, L, embed_dim)
    assert jnp.allclose(out, ref, atol=2e-3, rtol=2e-3), "f32 mismatch vs reference"

    # 2) attn_l2_norm=True path, with a broadcast (head-shared) bias to exercise
    #    the index_map / in-kernel broadcast handling (no materialized broadcast).
    bias_bcast = 0.5 * jax.random.normal(k_bias, (B, 1, L, S), jnp.float32)
    out_l2 = modified_self_attention(params, feat, prev_feat, bias_bcast,
                                     num_heads=num_heads, attn_l2_norm=True)
    out_l2 = jax.block_until_ready(out_l2)
    ref_l2 = reference(params, feat, prev_feat, bias_bcast,
                       num_heads=num_heads, attn_l2_norm=True)
    assert jnp.allclose(out_l2, ref_l2, atol=2e-3, rtol=2e-3), "l2-norm mismatch"

    # 3) bf16 activations/weights: MXU runs bf16 operands with f32 accumulation.
    feat_bf = feat.astype(jnp.bfloat16)
    prev_bf = prev_feat.astype(jnp.bfloat16)
    params_bf = {name: (val if name == "scale_mul_log" else val.astype(jnp.bfloat16))
                 for name, val in params.items()}
    out_bf = modified_self_attention(params_bf, feat_bf, prev_bf, attn_bias,
                                     num_heads=num_heads, attn_l2_norm=False)
    out_bf = jax.block_until_ready(out_bf)
    assert jnp.allclose(out_bf.astype(jnp.float32), ref, atol=5e-2, rtol=5e-2), \
        "bf16 mismatch vs f32 reference"

    print("KERNEL_OK")
</pallas_src>

<mosaic_0001>
module attributes {stable_mosaic.version = 11 : i64} {
  func.func @_linear_kernel(%arg0: i32, %arg1: i32, %arg2: i32, %arg3: memref<16x64xf32, #tpu.memory_space<vmem>>, %arg4: memref<64x64xf32, #tpu.memory_space<vmem>>, %arg5: memref<1x64xf32, #tpu.memory_space<vmem>>, %arg6: memref<16x64xf32, #tpu.memory_space<vmem>>, %arg7: memref<16x64xf32, #tpu.memory_space<vmem>>) attributes {dimension_semantics = [#tpu.dimension_semantics<parallel>, #tpu.dimension_semantics<parallel>, #tpu.dimension_semantics<arbitrary>], iteration_bounds = array<i64: 1, 1, 1>, scalar_prefetch = 0 : i64, scratch_operands = 1 : i64, tpu.core_type = #tpu.core_type<tc>, window_params = [{transform_indices = @transform_0, window_bounds = array<i64: 16, 64>}, {transform_indices = @transform_1, window_bounds = array<i64: 64, 64>}, {transform_indices = @transform_2, window_bounds = array<i64: 1, 64>}, {transform_indices = @transform_3, window_bounds = array<i64: 16, 64>}]} {
    %c0_i32 = arith.constant 0 : i32
    %0 = arith.cmpi eq, %arg2, %c0_i32 : i32
    %1 = arith.extui %0 : i1 to i32
    %c0_i32_0 = arith.constant 0 : i32
    %2 = arith.cmpi ne, %1, %c0_i32_0 : i32
    scf.if %2 {
      %cst_10 = arith.constant 0.000000e+00 : f32
      %12 = vector.broadcast %cst_10 : f32 to vector<16x64xf32>
      %c0_11 = arith.constant 0 : index
      %c0_12 = arith.constant 0 : index
      %13 = vector.load %arg7[%c0_11, %c0_12] : memref<16x64xf32, #tpu.memory_space<vmem>>, vector<16x64xf32>
      tpu.vector_store %arg7[%c0_11, %c0_12], %12 {strides = array<i32>} : memref<16x64xf32, #tpu.memory_space<vmem>>, vector<16x64xf32>,
    } else {
    }
    %c0 = arith.constant 0 : index
    %c0_1 = arith.constant 0 : index
    %3 = vector.load %arg7[%c0, %c0_1] : memref<16x64xf32, #tpu.memory_space<vmem>>, vector<16x64xf32>
    %c0_2 = arith.constant 0 : index
    %c0_3 = arith.constant 0 : index
    %4 = vector.load %arg3[%c0_2, %c0_3] : memref<16x64xf32, #tpu.memory_space<vmem>>, vector<16x64xf32>
    %c0_4 = arith.constant 0 : index
    %c0_5 = arith.constant 0 : index
    %5 = vector.load %arg4[%c0_4, %c0_5] : memref<64x64xf32, #tpu.memory_space<vmem>>, vector<64x64xf32>
    %cst = arith.constant dense<0.000000e+00> : vector<16x64xf32>
    %6 = tpu.matmul %4, %5, %cst {dimension_numbers = #tpu.dot_dimension_numbers<[1], [0], [0], [1], [0, 0, 1, 1], [], []>} : vector<16x64xf32>, vector<64x64xf32>, vector<16x64xf32> -> vector<16x64xf32>
    %7 = arith.addf %3, %6 : vector<16x64xf32>
    %c0_6 = arith.constant 0 : index
    %c0_7 = arith.constant 0 : index
    %8 = vector.load %arg7[%c0_6, %c0_7] : memref<16x64xf32, #tpu.memory_space<vmem>>, vector<16x64xf32>
    tpu.vector_store %arg7[%c0_6, %c0_7], %7 {strides = array<i32>} : memref<16x64xf32, #tpu.memory_space<vmem>>, vector<16x64xf32>,
    %c0_i32_8 = arith.constant 0 : i32
    %9 = arith.cmpi eq, %arg2, %c0_i32_8 : i32
    %10 = arith.extui %9 : i1 to i32
    %c0_i32_9 = arith.constant 0 : i32
    %11 = arith.cmpi ne, %10, %c0_i32_9 : i32
    scf.if %11 {
      %c0_10 = arith.constant 0 : index
      %c0_11 = arith.constant 0 : index
      %12 = vector.load %arg7[%c0_10, %c0_11] : memref<16x64xf32, #tpu.memory_space<vmem>>, vector<16x64xf32>
      %c0_12 = arith.constant 0 : index
      %c0_13 = arith.constant 0 : index
      %13 = vector.load %arg5[%c0_12, %c0_13] : memref<1x64xf32, #tpu.memory_space<vmem>>, vector<1x64xf32>
      %14 = vector.broadcast %13 : vector<1x64xf32> to vector<16x64xf32>
      %15 = arith.addf %12, %14 : vector<16x64xf32>
      %c0_14 = arith.constant 0 : index
      %c0_15 = arith.constant 0 : index
      %16 = vector.load %arg6[%c0_14, %c0_15] : memref<16x64xf32, #tpu.memory_space<vmem>>, vector<16x64xf32>
      tpu.vector_store %arg6[%c0_14, %c0_15], %15 {strides = array<i32>} : memref<16x64xf32, #tpu.memory_space<vmem>>, vector<16x64xf32>,
    } else {
    }
    return
  }
  func.func @transform_0(%arg0: i32, %arg1: i32, %arg2: i32) -> (i32, i32) {
    %c0_i32 = arith.constant 0 : i32
    return %arg0, %arg2 : i32, i32
  }
  func.func @transform_1(%arg0: i32, %arg1: i32, %arg2: i32) -> (i32, i32) {
    %c0_i32 = arith.constant 0 : i32
    return %arg2, %arg1 : i32, i32
  }
  func.func @transform_2(%arg0: i32, %arg1: i32, %arg2: i32) -> (i32, i32) {
    %c0_i32 = arith.constant 0 : i32
    %c0_i32_0 = arith.constant 0 : i32
    return %c0_i32, %arg1 : i32, i32
  }
  func.func @transform_3(%arg0: i32, %arg1: i32, %arg2: i32) -> (i32, i32) {
    %c0_i32 = arith.constant 0 : i32
    return %arg0, %arg1 : i32, i32
  }
}

</mosaic_0001>

<llo_original>
// kernel: tpu_custom_call.1
$region0: #{tpu_custom_call.1}
  #allocation0 [shape = 'u32[]', space=smem, size = 0x4, offset = 0x4, fixed_abs, tag = 'smem constant byte address 0x4 - core index']
  #allocation1 [shape = 'u32[72,128]{1,0:T(1,128)}', space=vmem, size = 0x9000, scoped, tag = 'internal scratch']
  #allocation2 [shape = 'f32[16,64]{1,0:T(8,128)}', space=vmem, size = 0x2000, scoped, tag = 'scratch operand']
  %s0 = inlined_call_operand.hbm [shape: f32[16,64], index: 0, kind: input, shape index: {}]
  %s1 = inlined_call_operand.hbm [shape: f32[64,64], index: 1, kind: input, shape index: {}]
  %s2 = inlined_call_operand.vmem [shape: f32[1,64], index: 2, kind: input, shape index: {}]
  %s3 = inlined_call_operand.hbm [shape: f32[16,64], index: 3, kind: output, shape index: {}]
  %s4 = sld [smem:[#allocation0]]
  $region38: #{tpu_custom_call.1} parent=0
    _
  %s6 = ssub.s32 1, %s4
  %s7 = scalar_select 0, %s6, %s4
  $region1: #{tpu_custom_call.1} parent=0
    #allocation3 [shape = 'u8[8192]{0}', space=vmem, size = 0x2000, scoped, tag = 'input window, operand 0, single buffered']
    #allocation4 [shape = 's32[1]{0}', space=sflag, size = 0x4, scoped, tag = 'scoped memory for tpu_custom_call.1']
    #allocation5 [shape = 's32[1]{0}', space=sflag, size = 0x4, scoped, tag = 'scoped memory for tpu_custom_call.1']
    #allocation6 [shape = 'u8[32768]{0}', space=vmem, size = 0x8000, scoped, tag = 'input window, operand 1, single buffered']
    #allocation7 [shape = 's32[1]{0}', space=sflag, size = 0x4, scoped, tag = 'scoped memory for tpu_custom_call.1']
    #allocation8 [shape = 'u8[8192]{0}', space=vmem, size = 0x2000, scoped, tag = 'output window, operand 0, single buffered']
    %8 = vsyncpa [#allocation4], 0
    %9 = vsyncpa [#allocation7], 0
    %10 = vsyncpa [#allocation5], 0
    // Predicated region
    $region2: #{tpu_custom_call.1} parent=1 // pred_check
      _
    $region3: #{tpu_custom_call.1} parent=1 // pred_check_branch
      %12 = sbr.rel (0) target = $region5
    $region4: #{tpu_custom_call.1} parent=1 // pred_region
      %14 = vsyncadd [#allocation4], 0
      %s15 = sshll.u32 %s0, 4
      %s16 = int_to_ptr.hbm [resolvable:$true] %s15
      %s17 = sshll.u32 [#allocation3], 4
      %s18 = int_to_ptr.vmem [resolvable:$true] %s17
      %23 = dma.hbm_to_vmem [thread:$0]  %s16, 256, %s18, [#allocation4], 128, 128, 8
    $region5: #{tpu_custom_call.1} parent=1 // pred_fallthru
      _
    // Predicated region
    $region6: #{tpu_custom_call.1} parent=1 // pred_check
      _
    $region7: #{tpu_custom_call.1} parent=1 // pred_check_branch
      %25 = sbr.rel (0) target = $region9
    $region8: #{tpu_custom_call.1} parent=1 // pred_region
      %27 = vsyncadd [#allocation7], 0
      %s28 = sshll.u32 %s1, 4
      %s29 = int_to_ptr.hbm [resolvable:$true] %s28
      %s30 = sshll.u32 [#allocation6], 4
      %s31 = int_to_ptr.vmem [resolvable:$true] %s30
      %36 = dma.hbm_to_vmem [thread:$0]  %s29, 1024, %s31, [#allocation7], 128, 128, 8
    $region9: #{tpu_custom_call.1} parent=1 // pred_fallthru
      _
    // Predicated region
    $region10: #{tpu_custom_call.1} parent=1 // pred_check
      _
    $region11: #{tpu_custom_call.1} parent=1 // pred_check_branch
      %38 = sbr.rel (0) target = $region13
    $region12: #{tpu_custom_call.1} parent=1 // pred_region
      _
    $region13: #{tpu_custom_call.1} parent=1 // pred_fallthru
      _
    // Predicated region
    $region14: #{tpu_custom_call.1} parent=1 // pred_check
      _
    $region15: #{tpu_custom_call.1} parent=1 // pred_check_branch
      %40 = sbr.rel (0) target = $region17
    $region16: #{tpu_custom_call.1} parent=1 // pred_region
      %42 = dma.done [#allocation4], 256
    $region17: #{tpu_custom_call.1} parent=1 // pred_fallthru
      _
    // Predicated region
    $region18: #{tpu_custom_call.1} parent=1 // pred_check
      _
    $region19: #{tpu_custom_call.1} parent=1 // pred_check_branch
      %44 = sbr.rel (0) target = $region21
    $region20: #{tpu_custom_call.1} parent=1 // pred_region
      %46 = dma.done [#allocation7], 1024
    $region21: #{tpu_custom_call.1} parent=1 // pred_fallthru
      _
    %p47 = scmp.eq.s32.totalorder 0, 0
    // Predicated region
    $region22: #{tpu_custom_call.1} parent=1 // pred_check
      %p48 = pneg %p47
    $region23: #{tpu_custom_call.1} parent=1 // pred_check_branch
      %50 = sbr.rel (%p48) target = $region25
    $region24: #{tpu_custom_call.1} parent=1 // pred_region
      %vm51 = vcmask 523264
      %52 = vst.msk [vmem:[#allocation2] sm:$0xff] %vm51, 0.0
      %53 = vst.msk [vmem:[#allocation2 + $0x8] sm:$0xff] %vm51, 0.0
    $region25: #{tpu_custom_call.1} parent=1 // pred_fallthru
      _
    %v54 = vld [vmem:[#allocation2] sm:$0xff]
    %v55 = vld [vmem:[#allocation2 + $0x8] sm:$0xff]
    %v56 = vld [vmem:[#allocation3] sm:$0xff]
    %v57 = vld [vmem:[#allocation3 + $0x8] sm:$0xff]
    %v58 = vld [vmem:[#allocation6] sm:$0xff]
    %v59 = vld [vmem:[#allocation6 + $0x8] sm:$0xff]
    %v60 = vld [vmem:[#allocation6 + $0x10] sm:$0xff]
    %v61 = vld [vmem:[#allocation6 + $0x18] sm:$0xff]
    %v62 = vld [vmem:[#allocation6 + $0x20] sm:$0xff]
    %v63 = vld [vmem:[#allocation6 + $0x28] sm:$0xff]
    %v64 = vld [vmem:[#allocation6 + $0x30] sm:$0xff]
    %v65 = vld [vmem:[#allocation6 + $0x38] sm:$0xff]
    %vm66 = vcmask 523264
    %v68 = vsel %vm66, %v56, 0
    %v71 = vsel %vm66, %v57, 0
    %73 = vmatpush.msra.mxu0 0.0
    %74 = vmatpush.msra.mxu0 0.0
    %75 = vmatpush.msra.mxu0 0.0
    %76 = vmatpush.msra.mxu0 0.0
    %77 = vmatpush.msra.mxu0 0.0
    %78 = vmatpush.msra.mxu0 0.0
    %79 = vmatpush.msra.mxu0 0.0
    %80 = vmatpush.msra.mxu0 0.0
    %81 = vmatpush.msra.mxu0 %v65
    %82 = vmatpush.msra.mxu0 %v64
    %83 = vmatpush.msra.mxu0 %v63
    %84 = vmatpush.msra.mxu0 %v62
    %85 = vmatpush.msra.mxu0 %v61
    %86 = vmatpush.msra.mxu0 %v60
    %87 = vmatpush.msra.mxu0 %v59
    %88 = vmatpush.msra.mxu0 %v58
    %89 = vmatmul.f32.gmra.mxu0 %v68
    %v90 = vpop.f32.mrf.mxu0
    %v91 = vadd.f32 0.0, %v90
    %92 = vmatmul.f32.gmra.mxu0 %v71
    %v93 = vpop.f32.mrf.mxu0
    %v94 = vadd.f32 0.0, %v93
    %95 = vdwg.mxu0
    %v96 = vadd.f32 %v54, %v91
    %v97 = vadd.f32 %v55, %v94
    %98 = vst.msk [vmem:[#allocation2] sm:$0xff] %vm66, %v96
    %99 = vst.msk [vmem:[#allocation2 + $0x8] sm:$0xff] %vm66, %v97
    // Predicated region
    $region26: #{tpu_custom_call.1} parent=1 // pred_check
      %p100 = pneg %p47
    $region27: #{tpu_custom_call.1} parent=1 // pred_check_branch
      %102 = sbr.rel (%p100) target = $region29
    $region28: #{tpu_custom_call.1} parent=1 // pred_region
      %v103 = vld [vmem:[#allocation2] sm:$0xff]
      %v104 = vld [vmem:[#allocation2 + $0x8] sm:$0xff]
      %v105 = vld [vmem:[%s2] sm:$0x1]
      %v107 = vperm.slane %v105, 0
      %v109 = vadd.f32 %v103, %v107
      %v110 = vadd.f32 %v104, %v107
      %111 = vst.msk [vmem:[#allocation8] sm:$0xff] %vm66, %v109
      %112 = vst.msk [vmem:[#allocation8 + $0x8] sm:$0xff] %vm66, %v110
    $region29: #{tpu_custom_call.1} parent=1 // pred_fallthru
      _
    // Predicated region
    $region30: #{tpu_custom_call.1} parent=1 // pred_check
      _
    $region31: #{tpu_custom_call.1} parent=1 // pred_check_branch
      %114 = sbr.rel (0) target = $region33
    $region32: #{tpu_custom_call.1} parent=1 // pred_region
      %116 = vsyncadd [#allocation5], 0
      %s117 = sshll.u32 [#allocation8], 4
      %s118 = int_to_ptr.vmem [resolvable:$true] %s117
      %s119 = sshll.u32 %s3, 4
      %s120 = int_to_ptr.hbm [resolvable:$true] %s119
      %125 = dma.vmem_to_hbm [thread:$0]  %s118, 256, %s120, [#allocation5], 128, 128, 8
    $region33: #{tpu_custom_call.1} parent=1 // pred_fallthru
      _
    // Predicated region
    $region34: #{tpu_custom_call.1} parent=1 // pred_check
      _
    $region35: #{tpu_custom_call.1} parent=1 // pred_check_branch
      %127 = sbr.rel (0) target = $region37
    $region36: #{tpu_custom_call.1} parent=1 // pred_region
      %129 = dma.done [#allocation5], 256
    $region37: #{tpu_custom_call.1} parent=1 // pred_fallthru
      _
    %130 = vsyncpa [#allocation4], 1
    %131 = vsyncpa [#allocation7], 1
    %132 = vsyncpa [#allocation5], 1

</llo_original>
